<compile_context>
chip_gen: v7x
topology: tpu7x:2x2x1
jax: 0.10.0
libtpu: 0.0.40
codegen_flags: <defaults>
</compile_context>

<pallas_src>
import functools
from itertools import combinations

import numpy as np
import jax
import jax.numpy as jnp
from jax.experimental import pallas as pl
from jax.experimental.pallas import tpu as pltpu


def _get_all_triplets(labels_np):
    """Host-side triplet enumeration (mirrors DotTripletLoss.get_all_triplets)."""
    # TODO(synk): data-dependent combinatorial triplet enumeration has no clean
    # Pallas equivalent; it stays on the host exactly as in the PyTorch module.
    triplets = []
    for label in set(labels_np.tolist()):
        label_mask = labels_np == label
        label_indices = np.where(label_mask)[0]
        if len(label_indices) < 2:
            continue
        negative_indices = np.where(np.logical_not(label_mask))[0]
        anchor_positives = list(combinations(label_indices, 2))
        triplets += [[ap[0], ap[1], neg]
                     for ap in anchor_positives for neg in negative_indices]
    if not triplets:
        return np.zeros((0, 3), dtype=np.int32)
    return np.array(triplets, dtype=np.int32)


def _dot_triplet_loss_kernel(count_ref,    # scalar prefetch (SMEM), (1,) int32
                             idx_ref,      # (T_TILE, 3) int32: [anchor, pos, neg]
                             emb_hbm,      # (N, D) bf16, memory_space=ANY (HBM)
                             out_ref,      # (1, 8, 128) f32 per-core partial sum
                             emb_vmem,     # (N, D) bf16 VMEM scratch
                             *rest,        # [g_ref], acc_ref, dma_sem
                             margin, use_gram):
    if use_gram:
        g_ref, acc_ref, dma_sem = rest
    else:
        acc_ref, dma_sem = rest

    c = pl.program_id(0)              # core-split ("parallel") axis
    k = pl.program_id(1)              # triplet-tile ("arbitrary") axis
    num_k = pl.num_programs(1)
    t_tile = idx_ref.shape[0]
    n = emb_vmem.shape[0]

    count = count_ref[0]
    tile_row0 = (c * num_k + k) * t_tile
    has_work = tile_row0 < count      # valid rows form a prefix of [0, T)

    # Start of each core's sweep: zero the per-core accumulator.
    @pl.when(k == 0)
    def _zero_acc():
        acc_ref[...] = jnp.zeros_like(acc_ref)

    # Load embeddings (and build the Gram matrix) once per core sweep, and only
    # if this core actually has any valid triplets.
    @pl.when(jnp.logical_and(k == 0, has_work))
    def _init():
        cp = pltpu.make_async_copy(emb_hbm, emb_vmem, dma_sem)
        cp.start()
        cp.wait()
        if use_gram:
            e = emb_vmem[...]         # bf16 operands, f32 accumulation on MXU
            g_ref[...] = jax.lax.dot_general(
                e, e, dimension_numbers=(((1,), (1,)), ((), ())),
                preferred_element_type=jnp.float32)

    # Skip all compute for fully padded tiles.
    @pl.when(has_work)
    def _compute():
        # f32 masks on the Gram path (gather matmul is f32 anyway; v5e-safe),
        # bf16 masks ({-1,0,1} exact) on the direct path -> full-rate bf16 MXU.
        mask_dtype = jnp.float32 if use_gram else jnp.bfloat16
        idx = idx_ref[...]                                    # (T_TILE, 3)
        a_idx = idx[:, 0:1]
        p_idx = idx[:, 1:2]
        n_idx = idx[:, 2:3]
        col = jax.lax.broadcasted_iota(jnp.int32, (t_tile, n), 1)
        a_oh = (a_idx == col).astype(mask_dtype)              # anchor one-hot
        d_oh = ((p_idx == col).astype(mask_dtype)             # pos - neg diff
                - (n_idx == col).astype(mask_dtype))

        if use_gram:
            m = jnp.dot(a_oh, g_ref[...],
                        preferred_element_type=jnp.float32)   # (T_TILE, N)
            scores = jnp.sum(m * d_oh, axis=1, keepdims=True)  # G[a,p]-G[a,n]
        else:
            e = emb_vmem[...]                                  # (N, D) bf16
            a_rows = jnp.dot(a_oh, e, preferred_element_type=jnp.float32)
            d_rows = jnp.dot(d_oh, e, preferred_element_type=jnp.float32)
            scores = jnp.sum(a_rows * d_rows, axis=1, keepdims=True)

        losses = jnp.maximum(jnp.float32(margin) - scores, 0.0)  # relu(an-ap+m)

        # Mask padded rows inside a partially valid tile.
        rows = tile_row0 + jax.lax.broadcasted_iota(jnp.int32, (t_tile, 1), 0)
        valid = rows < count
        acc_ref[...] += jnp.sum(jnp.where(valid, losses, 0.0),
                                axis=0, keepdims=True)

    # End of the core's sweep: emit the partial sum (lane-dense output block).
    @pl.when(k == num_k - 1)
    def _finalize():
        out_ref[...] = jnp.broadcast_to(acc_ref[...].reshape(1, 1, 1),
                                        out_ref.shape)


def dot_triplet_loss(embeddings, target, max_score=None, margin=10.0,
                     t_tile=None, num_core_splits=2, use_gram=None):
    """Equivalent of DotTripletLoss(margin).forward(embeddings, target, max_score).

    Returns (mean_loss, num_triplets).  `max_score` is unused (as in the
    reference forward).
    """
    del max_score
    labels_np = np.asarray(target)
    triplets = _get_all_triplets(labels_np)
    t = int(triplets.shape[0])
    if t == 0:
        # Mirrors the reference's try/except -> (0, 0) fallback.
        return jnp.float32(0.0), 0

    n, d = embeddings.shape

    if t_tile is None:
        # Bigger tiles amortize the ~0.35 us per-step overhead when per-tile
        # transients are small; keep multiples of 128 for MXU alignment.
        t_tile = 1024 if n <= 512 else (512 if n <= 2048 else 256)
    assert t_tile % 8 == 0

    # VMEM capacity (sizes the limit and gates the Gram path; v7x has 64 MiB).
    try:
        vmem_cap = int(getattr(pltpu.get_tpu_info(), "vmem_capacity_bytes",
                               64 * 1024 * 1024))
    except Exception:
        vmem_cap = 64 * 1024 * 1024  # conservative (v7x-sized) fallback

    gram_bytes = 4 * n * n
    if use_gram is None:
        # Gram pays off only when the per-tile f32 (T,N)x(N,N) gather beats two
        # bf16 (T,N)x(N,D) matmuls AND the f32 Gram scratch fits comfortably.
        use_gram = (3 * n <= 2 * d) and (gram_bytes <= vmem_cap // 4)

    # Bucket the TILE COUNT (not raw T) to a power of two: stable kernel shapes
    # across batches, no under-coverage for non-power-of-two t_tile, and padded
    # tiles are skipped in-kernel so the padding costs nothing.
    tiles_needed = pl.cdiv(t, t_tile)
    tiles_per_core = max(1, pl.next_power_of_2(pl.cdiv(tiles_needed,
                                                       num_core_splits)))
    t_pad = num_core_splits * tiles_per_core * t_tile
    assert t_pad >= t

    idx = np.zeros((t_pad, 3), dtype=np.int32)
    idx[:t] = triplets
    idx = jnp.asarray(idx)                                   # (T_pad, 3) int32
    count = jnp.asarray([t], dtype=jnp.int32)
    emb_bf16 = jnp.asarray(embeddings).astype(jnp.bfloat16)  # bf16 MXU inputs

    # VMEM budget: emb scratch + optional Gram + per-tile transients + slack.
    if use_gram:
        transients = 16 * t_tile * n
    else:
        transients = 8 * t_tile * n + 8 * t_tile * d
    vmem_needed = (n * d * 2 + (gram_bytes if use_gram else 0) + transients
                   + 2 * t_tile * 3 * 4 + (2 << 20))
    vmem_limit = int(min(int(vmem_cap * 0.9),
                         max(32 * 1024 * 1024, 2 * vmem_needed)))

    scratch = [pltpu.VMEM((n, d), jnp.bfloat16)]             # embeddings (single copy)
    if use_gram:
        scratch.append(pltpu.VMEM((n, n), jnp.float32))      # Gram matrix
    scratch.append(pltpu.VMEM((1, 1), jnp.float32))          # per-core loss sum
    scratch.append(pltpu.SemaphoreType.DMA)                  # embeddings DMA sem

    kernel = functools.partial(_dot_triplet_loss_kernel,
                               margin=float(margin), use_gram=use_gram)
    out = pl.pallas_call(
        kernel,
        out_shape=jax.ShapeDtypeStruct((num_core_splits, 8, 128), jnp.float32),
        grid_spec=pltpu.PrefetchScalarGridSpec(
            num_scalar_prefetch=1,
            grid=(num_core_splits, tiles_per_core),
            in_specs=[
                # merged [anchor, pos, neg] index columns, one DMA per tile
                pl.BlockSpec((t_tile, 3),
                             lambda c, k, cnt: (c * tiles_per_core + k, 0)),
                # embeddings stay in HBM; copied once per core sweep in-kernel
                pl.BlockSpec(memory_space=pl.ANY),
            ],
            out_specs=pl.BlockSpec((1, 8, 128), lambda c, k, cnt: (c, 0, 0)),
            scratch_shapes=scratch,
        ),
        compiler_params=pltpu.CompilerParams(
            dimension_semantics=("parallel", "arbitrary"),
            vmem_limit_bytes=vmem_limit,
        ),
    )(count, idx, emb_bf16)

    loss = jnp.sum(out[:, 0, 0]) / jnp.float32(t)
    return loss, t


if __name__ == "__main__":
    # Deterministic small example: 16 embeddings, hidden dim 32, 4 classes x 4
    # samples -> 288 triplets.  t_tile=128 with 2 core-splits exercises multiple
    # tiles per core, a partially masked tile and a fully padded (skipped) tile.
    key = jax.random.PRNGKey(0)
    N, D = 16, 32
    embeddings = jax.random.normal(key, (N, D), dtype=jnp.float32)
    target = np.repeat(np.arange(4), 4).astype(np.int64)
    margin = 10.0

    # Pure-numpy f32 reference (same math as the PyTorch module).
    emb_np = np.asarray(embeddings, dtype=np.float32)
    tris = _get_all_triplets(np.asarray(target))
    ap = (emb_np[tris[:, 0]] * emb_np[tris[:, 1]]).sum(1)
    an = (emb_np[tris[:, 0]] * emb_np[tris[:, 2]]).sum(1)
    ref = np.maximum(an - ap + margin, 0.0).mean()

    # Exercise both kernel paths: auto (Gram here, since N < 2D/3) and direct.
    for ug in (None, False):
        loss, n_triplets = dot_triplet_loss(embeddings, target, max_score=None,
                                            margin=margin, t_tile=128,
                                            num_core_splits=2, use_gram=ug)
        loss = jax.block_until_ready(loss)
        assert n_triplets == len(tris)
        # bf16 MXU inputs (f32 accumulation) vs f32 reference -> loose-ish tol.
        assert np.allclose(np.asarray(loss), ref, rtol=2e-2, atol=2e-2), (
            ug, float(loss), float(ref))

    print("KERNEL_OK")
</pallas_src>

<mosaic_0001>
module attributes {stable_mosaic.version = 11 : i64} {
  func.func @_dot_triplet_loss_kernel(%arg0: i32, %arg1: i32, %arg2: memref<1xi32, #tpu.memory_space<smem>>, %arg3: memref<128x3xi32, #tpu.memory_space<vmem>>, %arg4: memref<16x32xbf16, #tpu.memory_space<any>>, %arg5: memref<1x8x128xf32, #tpu.memory_space<vmem>>, %arg6: memref<16x32xbf16, #tpu.memory_space<vmem>>, %arg7: memref<16x16xf32, #tpu.memory_space<vmem>>, %arg8: memref<1x1xf32, #tpu.memory_space<vmem>>, %arg9: memref<!tpu.dma_semaphore, #tpu.memory_space<semaphore_mem>>) attributes {dimension_semantics = [#tpu.dimension_semantics<parallel>, #tpu.dimension_semantics<arbitrary>], iteration_bounds = array<i64: 2, 2>, scalar_prefetch = 1 : i64, scratch_operands = 4 : i64, tpu.core_type = #tpu.core_type<tc>, window_params = [{transform_indices = @transform_0, window_bounds = array<i64: 128, 3>}, {}, {transform_indices = @transform_2, window_bounds = array<i64: 1, 8, 128>}]} {
    %c0 = arith.constant 0 : index
    %0 = memref.load %arg2[%c0] : memref<1xi32, #tpu.memory_space<smem>>
    %c2_i32 = arith.constant 2 : i32
    %1 = arith.muli %arg0, %c2_i32 : i32
    %2 = arith.addi %1, %arg1 : i32
    %c128_i32 = arith.constant 128 : i32
    %3 = arith.muli %2, %c128_i32 : i32
    %4 = arith.cmpi slt, %3, %0 : i32
    %c0_i32 = arith.constant 0 : i32
    %5 = arith.cmpi eq, %arg1, %c0_i32 : i32
    %6 = arith.extui %5 : i1 to i32
    %c0_i32_0 = arith.constant 0 : i32
    %7 = arith.cmpi ne, %6, %c0_i32_0 : i32
    scf.if %7 {
      %cst = arith.constant 0.000000e+00 : f32
      %17 = vector.broadcast %cst : f32 to vector<1x1xf32>
      %c0_5 = arith.constant 0 : index
      %c0_6 = arith.constant 0 : index
      %18 = vector.load %arg8[%c0_5, %c0_6] : memref<1x1xf32, #tpu.memory_space<vmem>>, vector<1x1xf32>
      tpu.vector_store %arg8[%c0_5, %c0_6], %17 {strides = array<i32>} : memref<1x1xf32, #tpu.memory_space<vmem>>, vector<1x1xf32>,
    } else {
    }
    %c0_i32_1 = arith.constant 0 : i32
    %8 = arith.cmpi eq, %arg1, %c0_i32_1 : i32
    %9 = arith.andi %8, %4 : i1
    %10 = arith.extui %9 : i1 to i32
    %c0_i32_2 = arith.constant 0 : i32
    %11 = arith.cmpi ne, %10, %c0_i32_2 : i32
    scf.if %11 {
      tpu.enqueue_dma source(%arg4 : memref<16x32xbf16, #tpu.memory_space<any>>) target(%arg6 : memref<16x32xbf16, #tpu.memory_space<vmem>>) target_semaphore(%arg9 : memref<!tpu.dma_semaphore, #tpu.memory_space<semaphore_mem>>)
      tpu.wait_dma2 semaphore(%arg9 : memref<!tpu.dma_semaphore, #tpu.memory_space<semaphore_mem>>) src(%arg4 : memref<16x32xbf16, #tpu.memory_space<any>>) dst(%arg6 : memref<16x32xbf16, #tpu.memory_space<vmem>>)
      %c0_5 = arith.constant 0 : index
      %c0_6 = arith.constant 0 : index
      %17 = vector.load %arg6[%c0_5, %c0_6] : memref<16x32xbf16, #tpu.memory_space<vmem>>, vector<16x32xbf16>
      %cst = arith.constant dense<0.000000e+00> : vector<16x16xf32>
      %18 = tpu.matmul %17, %17, %cst {dimension_numbers = #tpu.dot_dimension_numbers<[1], [1], [0], [0], [0, 0, 1, 0], [], []>} : vector<16x32xbf16>, vector<16x32xbf16>, vector<16x16xf32> -> vector<16x16xf32>
      %c0_7 = arith.constant 0 : index
      %c0_8 = arith.constant 0 : index
      %19 = vector.load %arg7[%c0_7, %c0_8] : memref<16x16xf32, #tpu.memory_space<vmem>>, vector<16x16xf32>
      tpu.vector_store %arg7[%c0_7, %c0_8], %18 {strides = array<i32>} : memref<16x16xf32, #tpu.memory_space<vmem>>, vector<16x16xf32>,
    } else {
    }
    %12 = arith.extui %4 : i1 to i32
    %c0_i32_3 = arith.constant 0 : i32
    %13 = arith.cmpi ne, %12, %c0_i32_3 : i32
    scf.if %13 {
      %c0_5 = arith.constant 0 : index
      %c0_6 = arith.constant 0 : index
      %17 = vector.load %arg3[%c0_5, %c0_6] : memref<128x3xi32, #tpu.memory_space<vmem>>, vector<128x3xi32>
      %18 = vector.extract_strided_slice %17 {offsets = [0, 0], sizes = [128, 1], strides = [1, 1]} : vector<128x3xi32> to vector<128x1xi32>
      %19 = vector.extract_strided_slice %17 {offsets = [0, 1], sizes = [128, 1], strides = [1, 1]} : vector<128x3xi32> to vector<128x1xi32>
      %20 = vector.extract_strided_slice %17 {offsets = [0, 2], sizes = [128, 1], strides = [1, 1]} : vector<128x3xi32> to vector<128x1xi32>
      %21 = tpu.iota {dimensions = array<i32: 1>} : vector<128x16xi32>
      %22 = vector.broadcast %18 : vector<128x1xi32> to vector<128x16xi32>
      %23 = arith.cmpi eq, %22, %21 : vector<128x16xi32>
      %24 = arith.extui %23 : vector<128x16xi1> to vector<128x16xi32>
      %25 = arith.sitofp %24 : vector<128x16xi32> to vector<128x16xf32>
      %26 = vector.broadcast %19 : vector<128x1xi32> to vector<128x16xi32>
      %27 = arith.cmpi eq, %26, %21 : vector<128x16xi32>
      %28 = arith.extui %27 : vector<128x16xi1> to vector<128x16xi32>
      %29 = arith.sitofp %28 : vector<128x16xi32> to vector<128x16xf32>
      %30 = vector.broadcast %20 : vector<128x1xi32> to vector<128x16xi32>
      %31 = arith.cmpi eq, %30, %21 : vector<128x16xi32>
      %32 = arith.extui %31 : vector<128x16xi1> to vector<128x16xi32>
      %33 = arith.sitofp %32 : vector<128x16xi32> to vector<128x16xf32>
      %34 = arith.subf %29, %33 : vector<128x16xf32>
      %c0_7 = arith.constant 0 : index
      %c0_8 = arith.constant 0 : index
      %35 = vector.load %arg7[%c0_7, %c0_8] : memref<16x16xf32, #tpu.memory_space<vmem>>, vector<16x16xf32>
      %cst = arith.constant dense<0.000000e+00> : vector<128x16xf32>
      %36 = tpu.matmul %25, %35, %cst {dimension_numbers = #tpu.dot_dimension_numbers<[1], [0], [0], [1], [0, 0, 1, 1], [], []>} : vector<128x16xf32>, vector<16x16xf32>, vector<128x16xf32> -> vector<128x16xf32>
      %37 = arith.mulf %36, %34 : vector<128x16xf32>
      %cst_9 = arith.constant dense<0.000000e+00> : vector<128xf32>
      %38 = vector.multi_reduction <add>, %37, %cst_9 [1] : vector<128x16xf32> to vector<128xf32>
      %39 = vector.shape_cast %38 : vector<128xf32> to vector<128x1xf32>
      %cst_10 = arith.constant 1.000000e+01 : f32
      %40 = vector.broadcast %cst_10 : f32 to vector<128x1xf32>
      %41 = arith.subf %40, %39 : vector<128x1xf32>
      %cst_11 = arith.constant 0.000000e+00 : f32
      %42 = vector.broadcast %cst_11 : f32 to vector<128x1xf32>
      %43 = arith.maximumf %41, %42 : vector<128x1xf32>
      %44 = tpu.iota {dimensions = array<i32: 0>} : vector<128x1xi32>
      %45 = vector.broadcast %3 : i32 to vector<128x1xi32>
      %46 = arith.addi %45, %44 : vector<128x1xi32>
      %47 = vector.broadcast %0 : i32 to vector<128x1xi32>
      %48 = arith.cmpi slt, %46, %47 : vector<128x1xi32>
      %c0_12 = arith.constant 0 : index
      %c0_13 = arith.constant 0 : index
      %49 = vector.load %arg8[%c0_12, %c0_13] : memref<1x1xf32, #tpu.memory_space<vmem>>, vector<1x1xf32>
      %cst_14 = arith.constant 0.000000e+00 : f32
      %50 = vector.broadcast %cst_14 : f32 to vector<128x1xf32>
      %51 = arith.select %48, %43, %50 : vector<128x1xi1>, vector<128x1xf32>
      %cst_15 = arith.constant dense<0.000000e+00> : vector<1xf32>
      %52 = vector.multi_reduction <add>, %51, %cst_15 [0] : vector<128x1xf32> to vector<1xf32>
      %53 = vector.shape_cast %52 : vector<1xf32> to vector<1x1xf32>
      %54 = arith.addf %49, %53 : vector<1x1xf32>
      %c0_16 = arith.constant 0 : index
      %c0_17 = arith.constant 0 : index
      %55 = vector.load %arg8[%c0_16, %c0_17] : memref<1x1xf32, #tpu.memory_space<vmem>>, vector<1x1xf32>
      tpu.vector_store %arg8[%c0_16, %c0_17], %54 {strides = array<i32>} : memref<1x1xf32, #tpu.memory_space<vmem>>, vector<1x1xf32>,
    } else {
    }
    %c1_i32 = arith.constant 1 : i32
    %14 = arith.cmpi eq, %arg1, %c1_i32 : i32
    %15 = arith.extui %14 : i1 to i32
    %c0_i32_4 = arith.constant 0 : i32
    %16 = arith.cmpi ne, %15, %c0_i32_4 : i32
    scf.if %16 {
      %c0_5 = arith.constant 0 : index
      %c0_6 = arith.constant 0 : index
      %17 = vector.load %arg8[%c0_5, %c0_6] : memref<1x1xf32, #tpu.memory_space<vmem>>, vector<1x1xf32>
      %18 = vector.shape_cast %17 : vector<1x1xf32> to vector<1x1x1xf32>
      %19 = vector.shape_cast %18 : vector<1x1x1xf32> to vector<1x1x1xf32>
      %20 = vector.broadcast %19 : vector<1x1x1xf32> to vector<1x8x128xf32>
      %c0_7 = arith.constant 0 : index
      %c0_8 = arith.constant 0 : index
      %c0_9 = arith.constant 0 : index
      %21 = vector.load %arg5[%c0_7, %c0_8, %c0_9] : memref<1x8x128xf32, #tpu.memory_space<vmem>>, vector<1x8x128xf32>
      tpu.vector_store %arg5[%c0_7, %c0_8, %c0_9], %20 {strides = array<i32>} : memref<1x8x128xf32, #tpu.memory_space<vmem>>, vector<1x8x128xf32>,
    } else {
    }
    return
  }
  func.func @transform_0(%arg0: i32, %arg1: i32, %arg2: memref<1xi32, #tpu.memory_space<smem>>) -> (i32, i32) {
    %c2_i32 = arith.constant 2 : i32
    %0 = arith.muli %arg0, %c2_i32 : i32
    %1 = arith.addi %0, %arg1 : i32
    %c0_i32 = arith.constant 0 : i32
    %c0_i32_0 = arith.constant 0 : i32
    return %1, %c0_i32 : i32, i32
  }
  func.func @transform_2(%arg0: i32, %arg1: i32, %arg2: memref<1xi32, #tpu.memory_space<smem>>) -> (i32, i32, i32) {
    %c0_i32 = arith.constant 0 : i32
    %c0_i32_0 = arith.constant 0 : i32
    %c0_i32_1 = arith.constant 0 : i32
    return %arg0, %c0_i32, %c0_i32_0 : i32, i32, i32
  }
}

</mosaic_0001>

<llo_original>
// kernel: tpu_custom_call.1
$region0: #{tpu_custom_call.1}
  #allocation0 [shape = 'u32[]', space=smem, size = 0x4, offset = 0x4, fixed_abs, tag = 'smem constant byte address 0x4 - core index']
  #allocation1 [shape = 'u32[144,128]{1,0:T(1,128)}', space=vmem, size = 0x12000, scoped, tag = 'internal scratch']
  #allocation2 [shape = 'bf16[16,32]{1,0:T(16,128)(2,1)}', space=vmem, size = 0x1000, scoped, tag = 'scratch operand']
  #allocation3 [shape = 'f32[16,16]{1,0:T(8,128)}', space=vmem, size = 0x2000, scoped, tag = 'scratch operand']
  #allocation4 [shape = 'f32[1,1]{1,0:T(1,128)}', space=vmem, size = 0x200, scoped, tag = 'scratch operand']
  #allocation5 [shape = 's32[1]{0}', space=sflag, size = 0x4, scoped, tag = 'scratch operand']
  #allocation6 [shape = 's32[1]{0}', space=sflag, size = 0x4, scoped, tag = 'scoped memory for tpu_custom_call.1']
  #allocation7 [shape = 's32[1]{0:T(128)S(6)}', space=smem, size = 0x200, scoped, tag = 'prefetched SMEM operand 0']
  #allocation10 [shape = 's32[]', space=sflag, size = 0x4, offset = 0, fixed_abs, tag = 'sflag constant byte address 0x0 - dummy sync flag']
  %s0 = inlined_call_operand.<no memory space> [shape: s32[1], index: 0, kind: input, shape index: {}]
  %s1 = inlined_call_operand.vmem [shape: s32[512,3], index: 1, kind: input, shape index: {}]
  %s2 = inlined_call_operand.vmem [shape: bf16[16,32], index: 2, kind: input, shape index: {}]
  %s3 = inlined_call_operand.hbm [shape: f32[2,8,128], index: 3, kind: output, shape index: {}]
  %s4 = sld [smem:[#allocation0]]
  $region87: #{tpu_custom_call.1} parent=0
    _
  %s6 = ssub.s32 1, %s4
  %s7 = scalar_select 0, %s6, %s4
  %8 = sst [smem:[#allocation7]] %s0
  $region1: #{tpu_custom_call.1} parent=0
    #allocation8 [shape = 'u8[8192]{0}', space=vmem, size = 0x2000, scoped, tag = 'output window, operand 0']
    #allocation9 [shape = 's32[2]{0}', space=sflag, size = 0x8, scoped, tag = 'scoped memory for tpu_custom_call.1']
    %9 = vsyncpa [#allocation9], 0
    %s10 = scalar_lea.sflag [#allocation9], 1
    %11 = vsyncpa %s10, 0
    loop: start=0, step=1, limit=6
    $region2: #{tpu_custom_call.1} parent=1 // loop_pre_header
      _
    $region3: #{tpu_custom_call.1} parent=1 // loop_header
      %s13 = sphi 0, %s17
      %p14 = scmp.ge.s32.totalorder %s13, 6
      %s20 = sphi 0, %s32
      %s21 = sphi 0, %s28
      %s22 = sphi 0, %s20
      %s23 = sphi 0, %s21
      %s24 = sphi 0, %s22
      %s25 = sphi 0, %s23
      %s39 = sphi 0, %s41
      %s42 = sphi 0, %s39
      %s43 = sphi 0, %s42
      %s59 = sphi 0, %s43
      %s65 = sphi 0, %s67
      %s68 = sphi 0, %s65
      %s69 = sphi 0, %s68
      %s85 = sphi 0, %s69
    $region4: #{tpu_custom_call.1} parent=1 // loop_header_branch
      %16 = sbr.rel (%p14) target = $region8
    $region5: #{tpu_custom_call.1} parent=1 // loop_body
      %s18 = ssub.s32 %s13, 1
      %s19 = ssub.s32 %s13, 2
      %s26 = sadd.s32 1, %s21
      %p27 = scmp.ge.s32.totalorder %s26, 2
      %s28 = scalar_select %p27, 0, %s26
      %s29 = sadd.s32 1, %s20
      %s30 = scalar_select %p27, %s29, %s20
      %p31 = scmp.ge.s32.totalorder %s30, 2
      %s32 = scalar_select %p31, 0, %s30
      %s33 = smul.u32 %s20, 2
      %s34 = sadd.s32 %s33, %s21
      %s35 = smul.u32 %s32, 2
      %s36 = sadd.s32 %s35, %s28
      %s37 = ssub.s32 %s34, %s36
      %p38 = scmp.eq.s32.totalorder %s37, 0
      %s40 = sadd.s32 %s39, 1
      %s41 = scalar_select %p38, %s39, %s40
      %p44 = pneg %p38
      %p45 = scmp.eq.s32.totalorder %s13, 3
      %p46 = por %p44, %p45
      %p47 = scmp.ne.s32.totalorder %s39, %s42
      %p48 = scmp.eq.s32.totalorder %s13, 0
      %p49 = por %p47, %p48
      %p50 = scmp.ne.s32.totalorder %s39, %s42
      %p51 = scmp.eq.s32.totalorder %s18, 3
      %p52 = por %p50, %p51
      %p53 = scmp.ne.s32.totalorder %s42, %s43
      %p54 = scmp.eq.s32.totalorder %s18, 0
      %p55 = por %p53, %p54
      %p56 = scmp.ne.s32.totalorder %s42, %s43
      %p57 = scmp.eq.s32.totalorder %s19, 3
      %p58 = por %p56, %p57
      %p60 = scmp.ne.s32.totalorder %s43, %s59
      %p61 = scmp.eq.s32.totalorder %s19, 0
      %p62 = por %p60, %p61
      %s63 = ssub.s32 %s20, %s32
      %p64 = scmp.eq.s32.totalorder %s63, 0
      %s66 = sadd.s32 %s65, 1
      %s67 = scalar_select %p64, %s65, %s66
      %p70 = pneg %p64
      %p71 = scmp.eq.s32.totalorder %s13, 3
      %p72 = por %p70, %p71
      %p73 = scmp.ne.s32.totalorder %s65, %s68
      %p74 = scmp.eq.s32.totalorder %s13, 0
      %p75 = por %p73, %p74
      %p76 = scmp.ne.s32.totalorder %s65, %s68
      %p77 = scmp.eq.s32.totalorder %s18, 3
      %p78 = por %p76, %p77
      %p79 = scmp.ne.s32.totalorder %s68, %s69
      %p80 = scmp.eq.s32.totalorder %s18, 0
      %p81 = por %p79, %p80
      %p82 = scmp.ne.s32.totalorder %s68, %s69
      %p83 = scmp.eq.s32.totalorder %s19, 3
      %p84 = por %p82, %p83
      %p86 = scmp.ne.s32.totalorder %s69, %s85
      %p87 = scmp.eq.s32.totalorder %s19, 0
      %p88 = por %p86, %p87
      %p89 = scmp.le.s32.totalorder 1, %s13
      %p90 = scmp.lt.s32.totalorder %s13, 5
      %p91 = pnand %p89, %p90
      %p92 = pneg %p91
      // Predicated region
      $region9: #{tpu_custom_call.1} parent=5 // pred_check
        _
      $region10: #{tpu_custom_call.1} parent=5 // pred_check_branch
        %94 = sbr.rel (%p91) target = $region12
      $region11: #{tpu_custom_call.1} parent=5 // pred_region
        %s95 = ssub.s32 %s13, 1
      $region12: #{tpu_custom_call.1} parent=5 // pred_fallthru
        _
      %p96 = scmp.lt.s32.totalorder %s13, 4
      // Predicated region
      $region13: #{tpu_custom_call.1} parent=5 // pred_check
        %p97 = pneg %p96
      $region14: #{tpu_custom_call.1} parent=5 // pred_check_branch
        %99 = sbr.rel (%p97) target = $region16
      $region15: #{tpu_custom_call.1} parent=5 // pred_region
        // Predicated region
        $region17: #{tpu_custom_call.1} parent=15 // pred_check
          %p100 = pneg %p49
        $region18: #{tpu_custom_call.1} parent=15 // pred_check_branch
          %102 = sbr.rel (%p100) target = $region20
        $region19: #{tpu_custom_call.1} parent=15 // pred_region
          %s103 = smul.u32 %s20, 2
          %s104 = sadd.s32 %s103, %s21
          %s105 = smul.u32 16, %s104
          %p106 = scmp.lt.s32.totalorder %s105, 63
          %s107 = scalar_select %p106, %s105, 63
          %s108 = smul.addr %s107, 8
          %s109 = scalar_lea.vmem %s1, %s108
          %s110 = smul.u32 %s20, 2
          %s111 = sadd.s32 %s110, %s21
          %s112 = smul.u32 16, %s111
        $region20: #{tpu_custom_call.1} parent=15 // pred_fallthru
          _
      $region16: #{tpu_custom_call.1} parent=5 // pred_fallthru
        _
      %p113 = scmp.le.s32.totalorder 1, %s13
      %p114 = scmp.lt.s32.totalorder %s13, 5
      %p115 = pnand %p113, %p114
      %p116 = pneg %p115
      // Predicated region
      $region21: #{tpu_custom_call.1} parent=5 // pred_check
        _
      $region22: #{tpu_custom_call.1} parent=5 // pred_check_branch
        %118 = sbr.rel (%p115) target = $region24
      $region23: #{tpu_custom_call.1} parent=5 // pred_region
        %s119 = ssub.s32 %s13, 1
        %s120 = smul.u32 %s22, 2
        %s121 = sadd.s32 %s120, %s23
        %s122 = smul.u32 16, %s121
        %p123 = scmp.lt.s32.totalorder %s122, 63
        %s124 = scalar_select %p123, %s122, 63
        %s125 = smul.addr %s124, 8
        %s126 = scalar_lea.vmem %s1, %s125
        %p127 = pneg %p55
        %p128 = pneg %p52
        %p129 = pneg %p81
        %p130 = pneg %p78
        %s131 = sand.u32 %s68, 1
        %s132 = scalar_lea.sflag [#allocation9], %s131
        %s133 = sand.u32 %s68, 1
        %s134 = smul.addr %s133, 8
        %s135 = scalar_lea.vmem [#allocation8], %s134
        %s136 = smul.u32 %s22, 2
        %s137 = sadd.s32 %s136, %s23
        %s138 = smul.u32 16, %s137
        %p139 = scmp.lt.s32.totalorder %s138, 63
        %s140 = scalar_select %p139, %s138, 63
        %s141 = smul.addr %s140, 8
        %s142 = scalar_lea.vmem %s1, %s141
        %s143 = smul.u32 %s22, 2
        %s144 = sadd.s32 %s143, %s23
        %s145 = smul.u32 16, %s144
        %s147 = sld [smem:[#allocation7]]
        %s148 = smul.u32 %s22, 2
        %s149 = sadd.s32 %s148, %s23
        %s150 = smul.u32 %s149, 128
        %p151 = scmp.lt.s32.totalorder %s150, %s147
        %p152 = scmp.eq.s32.totalorder %s23, 0
        // Predicated region
        $region25: #{tpu_custom_call.1} parent=23 // pred_check
          %p153 = pneg %p152
        $region26: #{tpu_custom_call.1} parent=23 // pred_check_branch
          %155 = sbr.rel (%p153) target = $region28
        $region27: #{tpu_custom_call.1} parent=23 // pred_region
          %vm156 = vcmask 0
          %157 = vst.msk [vmem:[#allocation4] sm:$0x1] %vm156, 0.0
        $region28: #{tpu_custom_call.1} parent=23 // pred_fallthru
          _
        %p158 = pnand %p152, %p151
        %p159 = pneg %p158
        // Predicated region
        $region29: #{tpu_custom_call.1} parent=23 // pred_check
          _
        $region30: #{tpu_custom_call.1} parent=23 // pred_check_branch
          %161 = sbr.rel (%p158) target = $region32
        $region31: #{tpu_custom_call.1} parent=23 // pred_region
          %p163 = scmp.lt.u32.totalorder 8, 8
          %p164 = pneg %p163
          // Predicated region
          $region33: #{tpu_custom_call.1} parent=31 // pred_check
            _
          $region34: #{tpu_custom_call.1} parent=31 // pred_check_branch
            %166 = sbr.rel (%p163) target = $region36
          $region35: #{tpu_custom_call.1} parent=31 // pred_region
            %s181 = sand.u32 8, 7
            %p182 = scmp.eq.s32.totalorder %s181, 0
            // Predicated region
            $region48: #{tpu_custom_call.1} parent=35 // pred_check
              %p183 = pneg %p182
            $region49: #{tpu_custom_call.1} parent=35 // pred_check_branch
              %185 = sbr.rel (%p183) target = $region51
            $region50: #{tpu_custom_call.1} parent=35 // pred_region
              loop: start=0, step=1, limit=1
              $region52: #{tpu_custom_call.1} parent=50 // loop_pre_header
                _
              $region53: #{tpu_custom_call.1} parent=50 // loop_header
                %s187 = sphi 0, %s191
                %p188 = scmp.ge.s32.totalorder %s187, 1
                %s192 = sphi %s2, %s2
                %s193 = sphi [#allocation2], [#allocation2]
              $region54: #{tpu_custom_call.1} parent=50 // loop_header_branch
                %190 = sbr.rel (%p188) target = $region58
              $region55: #{tpu_custom_call.1} parent=50 // loop_body
                %v194 = vld [vmem:[%s192] sm:$0xff]
                %195 = vst [vmem:[%s193] sm:$0xff] %v194
              $region56: #{tpu_custom_call.1} parent=50 // loop_footer
                %s191 = sadd.s32 1, %s187
              $region57: #{tpu_custom_call.1} parent=50 // loop_footer_branch
                %186 = sbr.rel target = $region53
              $region58: #{tpu_custom_call.1} parent=50 // loop_exit
                _
            $region51: #{tpu_custom_call.1} parent=35 // pred_fallthru
              _
            %p196 = pneg %p182
            // Predicated region
            $region59: #{tpu_custom_call.1} parent=35 // pred_check
              _
            $region60: #{tpu_custom_call.1} parent=35 // pred_check_branch
              %198 = sbr.rel (%p182) target = $region62
            $region61: #{tpu_custom_call.1} parent=35 // pred_region
              %s199 = sand.u32 8, 7
            $region62: #{tpu_custom_call.1} parent=35 // pred_fallthru
              _
          $region36: #{tpu_custom_call.1} parent=31 // pred_fallthru
            _
          // Predicated region
          $region37: #{tpu_custom_call.1} parent=31 // pred_check
            %p167 = pneg %p163
          $region38: #{tpu_custom_call.1} parent=31 // pred_check_branch
            %169 = sbr.rel (%p167) target = $region40
          $region39: #{tpu_custom_call.1} parent=31 // pred_region
            %s170 = sshllo.u32 0, 8
            loop: start=0, step=1, limit=1
            $region41: #{tpu_custom_call.1} parent=39 // loop_pre_header
              _
            $region42: #{tpu_custom_call.1} parent=39 // loop_header
              %s172 = sphi 0, %s176
              %p173 = scmp.ge.s32.totalorder %s172, 1
              %s177 = sphi %s2, %s2
              %s178 = sphi [#allocation2], [#allocation2]
            $region43: #{tpu_custom_call.1} parent=39 // loop_header_branch
              %175 = sbr.rel (%p173) target = $region47
            $region44: #{tpu_custom_call.1} parent=39 // loop_body
              %v179 = vld [vmem:[%s177] sm:%s170]
              %180 = vst [vmem:[%s178] sm:%s170] %v179
            $region45: #{tpu_custom_call.1} parent=39 // loop_footer
              %s176 = sadd.s32 1, %s172
            $region46: #{tpu_custom_call.1} parent=39 // loop_footer_branch
              %171 = sbr.rel target = $region42
            $region47: #{tpu_custom_call.1} parent=39 // loop_exit
              _
          $region40: #{tpu_custom_call.1} parent=31 // pred_fallthru
            _
          // Predicated region
          $region63: #{tpu_custom_call.1} parent=31 // pred_check
            _
          $region64: #{tpu_custom_call.1} parent=31 // pred_check_branch
            %202 = sbr.rel (0) target = $region66
          $region65: #{tpu_custom_call.1} parent=31 // pred_region
            %203 = vsyncadd [#allocation5], 128
          $region66: #{tpu_custom_call.1} parent=31 // pred_fallthru
            _
          %s204 = smul.u32 4, 2
          %s205 = smul.u32 %s204, 1
          %s206 = sshll.u32 %s205, 4
          %207 = dma.done [#allocation5], %s206
          %v208 = vld [vmem:[#allocation2] sm:$0xff]
          %vm209 = vcmask 261120
          %v211 = vsel %vm209, %v208, 0
          %213 = vmatprep.subr.bf16.mxu0 0
          %214 = vmatpush1.bf16.xpose.msra.mxu0 %v211
          %215 = vmatprep.subr.bf16.mxu0 0
          %216 = vmatpush1.bf16.xpose.msra.mxu0 0
          %217 = vmatprep.subr.bf16.mxu0 0
          %218 = vmatpush1.bf16.xpose.msra.mxu0 0
          %219 = vmatprep.subr.bf16.mxu0 0
          %220 = vmatpush1.bf16.xpose.msra.mxu0 0
          %221 = vmatprep.subr.bf16.mxu0 0
          %222 = vmatpush1.bf16.xpose.msra.mxu0 0
          %223 = vmatprep.subr.bf16.mxu0 0
          %224 = vmatpush1.bf16.xpose.msra.mxu0 0
          %225 = vmatprep.subr.bf16.mxu0 0
          %226 = vmatpush1.bf16.xpose.msra.mxu0 0
          %227 = vmatprep.subr.bf16.mxu0 0
          %228 = vmatpush1.bf16.xpose.msra.mxu0 0
          %229 = vmatprep.subr.bf16.mxu0 0
          %230 = vmatpush1.bf16.xpose.msra.mxu0 0
          %231 = vmatprep.subr.bf16.mxu0 0
          %232 = vmatpush1.bf16.xpose.msra.mxu0 0
          %233 = vmatprep.subr.bf16.mxu0 0
          %234 = vmatpush1.bf16.xpose.msra.mxu0 0
          %235 = vmatprep.subr.bf16.mxu0 0
          %236 = vmatpush1.bf16.xpose.msra.mxu0 0
          %237 = vmatprep.subr.bf16.mxu0 0
          %238 = vmatpush1.bf16.xpose.msra.mxu0 0
          %239 = vmatprep.subr.bf16.mxu0 0
          %240 = vmatpush1.bf16.xpose.msra.mxu0 0
          %241 = vmatprep.subr.bf16.mxu0 0
          %242 = vmatpush1.bf16.xpose.msra.mxu0 0
          %243 = vmatprep.subr.bf16.mxu0 0
          %244 = vmatpush1.bf16.xpose.msra.mxu0 0
          %245 = vmatprep.mubr.bf16.mxu0 0
          %246 = vmatmul.mubr.bf16.gmra.mrb[0].mxu0 %v211
          %v247 = vpop.f32.mrb[0].mxu0
          %v248 = vadd.f32 0.0, %v247
          %v249 = vpop.f32.mrb[0].mxu0
          %v250 = vpop.f32.mrb[0].mxu0
          %v251 = vadd.f32 0.0, %v250
          %v252 = vpop.f32.mrb[0].mxu0
          %253 = vdwg.mxu0
          %vm254 = vcmask 130048
          %255 = vst.msk [vmem:[#allocation3] sm:$0xff] %vm254, %v248
          %256 = vst.msk [vmem:[#allocation3 + $0x8] sm:$0xff] %vm254, %v251
        $region32: #{tpu_custom_call.1} parent=23 // pred_fallthru
          _
        // Predicated region
        $region67: #{tpu_custom_call.1} parent=23 // pred_check
          %p257 = pneg %p151
        $region68: #{tpu_custom_call.1} parent=23 // pred_check_branch
          %259 = sbr.rel (%p257) target = $region70
        $region69: #{tpu_custom_call.1} parent=23 // pred_region
          %v260 = vld [vmem:[%s142] sm:$0xff]
          %v261 = vld [vmem:[%s142 + $0x8] sm:$0xff]
          %v262 = vld [vmem:[%s142 + $0x10] sm:$0xff]
          %v263 = vld [vmem:[%s142 + $0x18] sm:$0xff]
          %v264 = vld [vmem:[%s142 + $0x20] sm:$0xff]
          %v265 = vld [vmem:[%s142 + $0x28] sm:$0xff]
          %v266 = vld [vmem:[%s142 + $0x30] sm:$0xff]
          %v267 = vld [vmem:[%s142 + $0x38] sm:$0xff]
          %v268 = vld [vmem:[%s142 + $0x40] sm:$0xff]
          %v269 = vld [vmem:[%s142 + $0x48] sm:$0xff]
          %v270 = vld [vmem:[%s142 + $0x50] sm:$0xff]
          %v271 = vld [vmem:[%s142 + $0x58] sm:$0xff]
          %v272 = vld [vmem:[%s142 + $0x60] sm:$0xff]
          %v273 = vld [vmem:[%s142 + $0x68] sm:$0xff]
          %v274 = vld [vmem:[%s142 + $0x70] sm:$0xff]
          %v275 = vld [vmem:[%s142 + $0x78] sm:$0xff]
          %v276 = vlaneseq
          %v277 = vand.u32 %v276, 127
          %278 = vset.pattern.permute.xlu0 0
          %279 = vperm.xlu0 %278, %v260
          %v280 = vpop.permute.xlu0 %279
          %281 = vset.pattern.permute.xlu0 0
          %282 = vperm.xlu0 %281, %v261
          %v283 = vpop.permute.xlu0 %282
          %284 = vset.pattern.permute.xlu0 0
          %285 = vperm.xlu0 %284, %v262
          %v286 = vpop.permute.xlu0 %285
          %287 = vset.pattern.permute.xlu0 0
          %288 = vperm.xlu0 %287, %v263
          %v289 = vpop.permute.xlu0 %288
          %290 = vset.pattern.permute.xlu0 0
          %291 = vperm.xlu0 %290, %v264
          %v292 = vpop.permute.xlu0 %291
          %293 = vset.pattern.permute.xlu0 0
          %294 = vperm.xlu0 %293, %v265
          %v295 = vpop.permute.xlu0 %294
          %296 = vset.pattern.permute.xlu0 0
          %297 = vperm.xlu0 %296, %v266
          %v298 = vpop.permute.xlu0 %297
          %299 = vset.pattern.permute.xlu0 0
          %300 = vperm.xlu0 %299, %v267
          %v301 = vpop.permute.xlu0 %300
          %302 = vset.pattern.permute.xlu0 0
          %303 = vperm.xlu0 %302, %v268
          %v304 = vpop.permute.xlu0 %303
          %305 = vset.pattern.permute.xlu0 0
          %306 = vperm.xlu0 %305, %v269
          %v307 = vpop.permute.xlu0 %306
          %308 = vset.pattern.permute.xlu0 0
          %309 = vperm.xlu0 %308, %v270
          %v310 = vpop.permute.xlu0 %309
          %311 = vset.pattern.permute.xlu0 0
          %312 = vperm.xlu0 %311, %v271
          %v313 = vpop.permute.xlu0 %312
          %314 = vset.pattern.permute.xlu0 0
          %315 = vperm.xlu0 %314, %v272
          %v316 = vpop.permute.xlu0 %315
          %317 = vset.pattern.permute.xlu0 0
          %318 = vperm.xlu0 %317, %v273
          %v319 = vpop.permute.xlu0 %318
          %320 = vset.pattern.permute.xlu0 0
          %321 = vperm.xlu0 %320, %v274
          %v322 = vpop.permute.xlu0 %321
          %323 = vset.pattern.permute.xlu0 0
          %324 = vperm.xlu0 %323, %v275
          %v325 = vpop.permute.xlu0 %324
          %vm326 = vcmp.eq.s32.totalorder %v280, %v277
          %vm327 = vcmp.eq.s32.totalorder %v283, %v277
          %vm328 = vcmp.eq.s32.totalorder %v286, %v277
          %vm329 = vcmp.eq.s32.totalorder %v289, %v277
          %vm330 = vcmp.eq.s32.totalorder %v292, %v277
          %vm331 = vcmp.eq.s32.totalorder %v295, %v277
          %vm332 = vcmp.eq.s32.totalorder %v298, %v277
          %vm333 = vcmp.eq.s32.totalorder %v301, %v277
          %vm334 = vcmp.eq.s32.totalorder %v304, %v277
          %vm335 = vcmp.eq.s32.totalorder %v307, %v277
          %vm336 = vcmp.eq.s32.totalorder %v310, %v277
          %vm337 = vcmp.eq.s32.totalorder %v313, %v277
          %vm338 = vcmp.eq.s32.totalorder %v316, %v277
          %vm339 = vcmp.eq.s32.totalorder %v319, %v277
          %vm340 = vcmp.eq.s32.totalorder %v322, %v277
          %vm341 = vcmp.eq.s32.totalorder %v325, %v277
          %v342 = vsel %vm326, 1, 0
          %v343 = vsel %vm327, 1, 0
          %v344 = vsel %vm328, 1, 0
          %v345 = vsel %vm329, 1, 0
          %v346 = vsel %vm330, 1, 0
          %v347 = vsel %vm331, 1, 0
          %v348 = vsel %vm332, 1, 0
          %v349 = vsel %vm333, 1, 0
          %v350 = vsel %vm334, 1, 0
          %v351 = vsel %vm335, 1, 0
          %v352 = vsel %vm336, 1, 0
          %v353 = vsel %vm337, 1, 0
          %v354 = vsel %vm338, 1, 0
          %v355 = vsel %vm339, 1, 0
          %v356 = vsel %vm340, 1, 0
          %v357 = vsel %vm341, 1, 0
          %v358 = vcvt.s32.f32 %v342
          %v359 = vcvt.s32.f32 %v343
          %v360 = vcvt.s32.f32 %v344
          %v361 = vcvt.s32.f32 %v345
          %v362 = vcvt.s32.f32 %v346
          %v363 = vcvt.s32.f32 %v347
          %v364 = vcvt.s32.f32 %v348
          %v365 = vcvt.s32.f32 %v349
          %v366 = vcvt.s32.f32 %v350
          %v367 = vcvt.s32.f32 %v351
          %v368 = vcvt.s32.f32 %v352
          %v369 = vcvt.s32.f32 %v353
          %v370 = vcvt.s32.f32 %v354
          %v371 = vcvt.s32.f32 %v355
          %v372 = vcvt.s32.f32 %v356
          %v373 = vcvt.s32.f32 %v357
          %374 = vset.pattern.permute.xlu0 1
          %375 = vperm.xlu0 %374, %v260
          %v376 = vpop.permute.xlu0 %375
          %377 = vset.pattern.permute.xlu0 1
          %378 = vperm.xlu0 %377, %v261
          %v379 = vpop.permute.xlu0 %378
          %380 = vset.pattern.permute.xlu0 1
          %381 = vperm.xlu0 %380, %v262
          %v382 = vpop.permute.xlu0 %381
          %383 = vset.pattern.permute.xlu0 1
          %384 = vperm.xlu0 %383, %v263
          %v385 = vpop.permute.xlu0 %384
          %386 = vset.pattern.permute.xlu0 1
          %387 = vperm.xlu0 %386, %v264
          %v388 = vpop.permute.xlu0 %387
          %389 = vset.pattern.permute.xlu0 1
          %390 = vperm.xlu0 %389, %v265
          %v391 = vpop.permute.xlu0 %390
          %392 = vset.pattern.permute.xlu0 1
          %393 = vperm.xlu0 %392, %v266
          %v394 = vpop.permute.xlu0 %393
          %395 = vset.pattern.permute.xlu0 1
          %396 = vperm.xlu0 %395, %v267
          %v397 = vpop.permute.xlu0 %396
          %398 = vset.pattern.permute.xlu0 1
          %399 = vperm.xlu0 %398, %v268
          %v400 = vpop.permute.xlu0 %399
          %401 = vset.pattern.permute.xlu0 1
          %402 = vperm.xlu0 %401, %v269
          %v403 = vpop.permute.xlu0 %402
          %404 = vset.pattern.permute.xlu0 1
          %405 = vperm.xlu0 %404, %v270
          %v406 = vpop.permute.xlu0 %405
          %407 = vset.pattern.permute.xlu0 1
          %408 = vperm.xlu0 %407, %v271
          %v409 = vpop.permute.xlu0 %408
          %410 = vset.pattern.permute.xlu0 1
          %411 = vperm.xlu0 %410, %v272
          %v412 = vpop.permute.xlu0 %411
          %413 = vset.pattern.permute.xlu0 1
          %414 = vperm.xlu0 %413, %v273
          %v415 = vpop.permute.xlu0 %414
          %416 = vset.pattern.permute.xlu0 1
          %417 = vperm.xlu0 %416, %v274
          %v418 = vpop.permute.xlu0 %417
          %419 = vset.pattern.permute.xlu0 1
          %420 = vperm.xlu0 %419, %v275
          %v421 = vpop.permute.xlu0 %420
          %vm422 = vcmp.eq.s32.totalorder %v376, %v277
          %vm423 = vcmp.eq.s32.totalorder %v379, %v277
          %vm424 = vcmp.eq.s32.totalorder %v382, %v277
          %vm425 = vcmp.eq.s32.totalorder %v385, %v277
          %vm426 = vcmp.eq.s32.totalorder %v388, %v277
          %vm427 = vcmp.eq.s32.totalorder %v391, %v277
          %vm428 = vcmp.eq.s32.totalorder %v394, %v277
          %vm429 = vcmp.eq.s32.totalorder %v397, %v277
          %vm430 = vcmp.eq.s32.totalorder %v400, %v277
          %vm431 = vcmp.eq.s32.totalorder %v403, %v277
          %vm432 = vcmp.eq.s32.totalorder %v406, %v277
          %vm433 = vcmp.eq.s32.totalorder %v409, %v277
          %vm434 = vcmp.eq.s32.totalorder %v412, %v277
          %vm435 = vcmp.eq.s32.totalorder %v415, %v277
          %vm436 = vcmp.eq.s32.totalorder %v418, %v277
          %vm437 = vcmp.eq.s32.totalorder %v421, %v277
          %v438 = vsel %vm422, 1, 0
          %v439 = vsel %vm423, 1, 0
          %v440 = vsel %vm424, 1, 0
          %v441 = vsel %vm425, 1, 0
          %v442 = vsel %vm426, 1, 0
          %v443 = vsel %vm427, 1, 0
          %v444 = vsel %vm428, 1, 0
          %v445 = vsel %vm429, 1, 0
          %v446 = vsel %vm430, 1, 0
          %v447 = vsel %vm431, 1, 0
          %v448 = vsel %vm432, 1, 0
          %v449 = vsel %vm433, 1, 0
          %v450 = vsel %vm434, 1, 0
          %v451 = vsel %vm435, 1, 0
          %v452 = vsel %vm436, 1, 0
          %v453 = vsel %vm437, 1, 0
          %v454 = vcvt.s32.f32 %v438
          %v455 = vcvt.s32.f32 %v439
          %v456 = vcvt.s32.f32 %v440
          %v457 = vcvt.s32.f32 %v441
          %v458 = vcvt.s32.f32 %v442
          %v459 = vcvt.s32.f32 %v443
          %v460 = vcvt.s32.f32 %v444
          %v461 = vcvt.s32.f32 %v445
          %v462 = vcvt.s32.f32 %v446
          %v463 = vcvt.s32.f32 %v447
          %v464 = vcvt.s32.f32 %v448
          %v465 = vcvt.s32.f32 %v449
          %v466 = vcvt.s32.f32 %v450
          %v467 = vcvt.s32.f32 %v451
          %v468 = vcvt.s32.f32 %v452
          %v469 = vcvt.s32.f32 %v453
          %470 = vset.pattern.permute.xlu0 2
          %471 = vperm.xlu0 %470, %v260
          %v472 = vpop.permute.xlu0 %471
          %473 = vset.pattern.permute.xlu0 2
          %474 = vperm.xlu0 %473, %v261
          %v475 = vpop.permute.xlu0 %474
          %476 = vset.pattern.permute.xlu0 2
          %477 = vperm.xlu0 %476, %v262
          %v478 = vpop.permute.xlu0 %477
          %479 = vset.pattern.permute.xlu0 2
          %480 = vperm.xlu0 %479, %v263
          %v481 = vpop.permute.xlu0 %480
          %482 = vset.pattern.permute.xlu0 2
          %483 = vperm.xlu0 %482, %v264
          %v484 = vpop.permute.xlu0 %483
          %485 = vset.pattern.permute.xlu0 2
          %486 = vperm.xlu0 %485, %v265
          %v487 = vpop.permute.xlu0 %486
          %488 = vset.pattern.permute.xlu0 2
          %489 = vperm.xlu0 %488, %v266
          %v490 = vpop.permute.xlu0 %489
          %491 = vset.pattern.permute.xlu0 2
          %492 = vperm.xlu0 %491, %v267
          %v493 = vpop.permute.xlu0 %492
          %494 = vset.pattern.permute.xlu0 2
          %495 = vperm.xlu0 %494, %v268
          %v496 = vpop.permute.xlu0 %495
          %497 = vset.pattern.permute.xlu0 2
          %498 = vperm.xlu0 %497, %v269
          %v499 = vpop.permute.xlu0 %498
          %500 = vset.pattern.permute.xlu0 2
          %501 = vperm.xlu0 %500, %v270
          %v502 = vpop.permute.xlu0 %501
          %503 = vset.pattern.permute.xlu0 2
          %504 = vperm.xlu0 %503, %v271
          %v505 = vpop.permute.xlu0 %504
          %506 = vset.pattern.permute.xlu0 2
          %507 = vperm.xlu0 %506, %v272
          %v508 = vpop.permute.xlu0 %507
          %509 = vset.pattern.permute.xlu0 2
          %510 = vperm.xlu0 %509, %v273
          %v511 = vpop.permute.xlu0 %510
          %512 = vset.pattern.permute.xlu0 2
          %513 = vperm.xlu0 %512, %v274
          %v514 = vpop.permute.xlu0 %513
          %515 = vset.pattern.permute.xlu0 2
          %516 = vperm.xlu0 %515, %v275
          %v517 = vpop.permute.xlu0 %516
          %vm518 = vcmp.eq.s32.totalorder %v472, %v277
          %vm519 = vcmp.eq.s32.totalorder %v475, %v277
          %vm520 = vcmp.eq.s32.totalorder %v478, %v277
          %vm521 = vcmp.eq.s32.totalorder %v481, %v277
          %vm522 = vcmp.eq.s32.totalorder %v484, %v277
          %vm523 = vcmp.eq.s32.totalorder %v487, %v277
          %vm524 = vcmp.eq.s32.totalorder %v490, %v277
          %vm525 = vcmp.eq.s32.totalorder %v493, %v277
          %vm526 = vcmp.eq.s32.totalorder %v496, %v277
          %vm527 = vcmp.eq.s32.totalorder %v499, %v277
          %vm528 = vcmp.eq.s32.totalorder %v502, %v277
          %vm529 = vcmp.eq.s32.totalorder %v505, %v277
          %vm530 = vcmp.eq.s32.totalorder %v508, %v277
          %vm531 = vcmp.eq.s32.totalorder %v511, %v277
          %vm532 = vcmp.eq.s32.totalorder %v514, %v277
          %vm533 = vcmp.eq.s32.totalorder %v517, %v277
          %v534 = vsel %vm518, 1, 0
          %v535 = vsel %vm519, 1, 0
          %v536 = vsel %vm520, 1, 0
          %v537 = vsel %vm521, 1, 0
          %v538 = vsel %vm522, 1, 0
          %v539 = vsel %vm523, 1, 0
          %v540 = vsel %vm524, 1, 0
          %v541 = vsel %vm525, 1, 0
          %v542 = vsel %vm526, 1, 0
          %v543 = vsel %vm527, 1, 0
          %v544 = vsel %vm528, 1, 0
          %v545 = vsel %vm529, 1, 0
          %v546 = vsel %vm530, 1, 0
          %v547 = vsel %vm531, 1, 0
          %v548 = vsel %vm532, 1, 0
          %v549 = vsel %vm533, 1, 0
          %v550 = vcvt.s32.f32 %v534
          %v551 = vcvt.s32.f32 %v535
          %v552 = vcvt.s32.f32 %v536
          %v553 = vcvt.s32.f32 %v537
          %v554 = vcvt.s32.f32 %v538
          %v555 = vcvt.s32.f32 %v539
          %v556 = vcvt.s32.f32 %v540
          %v557 = vcvt.s32.f32 %v541
          %v558 = vcvt.s32.f32 %v542
          %v559 = vcvt.s32.f32 %v543
          %v560 = vcvt.s32.f32 %v544
          %v561 = vcvt.s32.f32 %v545
          %v562 = vcvt.s32.f32 %v546
          %v563 = vcvt.s32.f32 %v547
          %v564 = vcvt.s32.f32 %v548
          %v565 = vcvt.s32.f32 %v549
          %v566 = vsub.f32 %v454, %v550
          %v567 = vsub.f32 %v455, %v551
          %v568 = vsub.f32 %v456, %v552
          %v569 = vsub.f32 %v457, %v553
          %v570 = vsub.f32 %v458, %v554
          %v571 = vsub.f32 %v459, %v555
          %v572 = vsub.f32 %v460, %v556
          %v573 = vsub.f32 %v461, %v557
          %v574 = vsub.f32 %v462, %v558
          %v575 = vsub.f32 %v463, %v559
          %v576 = vsub.f32 %v464, %v560
          %v577 = vsub.f32 %v465, %v561
          %v578 = vsub.f32 %v466, %v562
          %v579 = vsub.f32 %v467, %v563
          %v580 = vsub.f32 %v468, %v564
          %v581 = vsub.f32 %v469, %v565
          %v582 = vld [vmem:[#allocation3] sm:$0xff]
          %v583 = vld [vmem:[#allocation3 + $0x8] sm:$0xff]
          %vm584 = vcmask 130048
          %v586 = vsel %vm584, %v358, 0
          %v589 = vsel %vm584, %v359, 0
          %v592 = vsel %vm584, %v360, 0
          %v595 = vsel %vm584, %v361, 0
          %v598 = vsel %vm584, %v362, 0
          %v601 = vsel %vm584, %v363, 0
          %v604 = vsel %vm584, %v364, 0
          %v607 = vsel %vm584, %v365, 0
          %v610 = vsel %vm584, %v366, 0
          %v613 = vsel %vm584, %v367, 0
          %v616 = vsel %vm584, %v368, 0
          %v619 = vsel %vm584, %v369, 0
          %v622 = vsel %vm584, %v370, 0
          %v625 = vsel %vm584, %v371, 0
          %v628 = vsel %vm584, %v372, 0
          %v631 = vsel %vm584, %v373, 0
          %633 = vmatprep.subr.mxu0 0.0
          %634 = vmatpush1.msra.mxu0 %v582
          %635 = vmatprep.subr.mxu0 0.0
          %636 = vmatpush1.msra.mxu0 %v583
          %637 = vmatprep.subr.mxu0 0.0
          %638 = vmatpush1.msra.mxu0 0.0
          %639 = vmatprep.subr.mxu0 0.0
          %640 = vmatpush1.msra.mxu0 0.0
          %641 = vmatprep.subr.mxu0 0.0
          %642 = vmatpush1.msra.mxu0 0.0
          %643 = vmatprep.subr.mxu0 0.0
          %644 = vmatpush1.msra.mxu0 0.0
          %645 = vmatprep.subr.mxu0 0.0
          %646 = vmatpush1.msra.mxu0 0.0
          %647 = vmatprep.subr.mxu0 0.0
          %648 = vmatpush1.msra.mxu0 0.0
          %649 = vmatprep.subr.mxu0 0.0
          %650 = vmatpush1.msra.mxu0 0.0
          %651 = vmatprep.subr.mxu0 0.0
          %652 = vmatpush1.msra.mxu0 0.0
          %653 = vmatprep.subr.mxu0 0.0
          %654 = vmatpush1.msra.mxu0 0.0
          %655 = vmatprep.subr.mxu0 0.0
          %656 = vmatpush1.msra.mxu0 0.0
          %657 = vmatprep.subr.mxu0 0.0
          %658 = vmatpush1.msra.mxu0 0.0
          %659 = vmatprep.subr.mxu0 0.0
          %660 = vmatpush1.msra.mxu0 0.0
          %661 = vmatprep.subr.mxu0 0.0
          %662 = vmatpush1.msra.mxu0 0.0
          %663 = vmatprep.subr.mxu0 0.0
          %664 = vmatpush1.msra.mxu0 0.0
          %665 = vmatprep.subr.mxu0 0.0
          %666 = vmatpush1.msra.mxu0 0.0
          %667 = vmatprep.subr.mxu0 0.0
          %668 = vmatpush1.msra.mxu0 0.0
          %669 = vmatprep.subr.mxu0 0.0
          %670 = vmatpush1.msra.mxu0 0.0
          %671 = vmatprep.subr.mxu0 0.0
          %672 = vmatpush1.msra.mxu0 0.0
          %673 = vmatprep.subr.mxu0 0.0
          %674 = vmatpush1.msra.mxu0 0.0
          %675 = vmatprep.subr.mxu0 0.0
          %676 = vmatpush1.msra.mxu0 0.0
          %677 = vmatprep.subr.mxu0 0.0
          %678 = vmatpush1.msra.mxu0 0.0
          %679 = vmatprep.subr.mxu0 0.0
          %680 = vmatpush1.msra.mxu0 0.0
          %681 = vmatprep.subr.mxu0 0.0
          %682 = vmatpush1.msra.mxu0 0.0
          %683 = vmatprep.subr.mxu0 0.0
          %684 = vmatpush1.msra.mxu0 0.0
          %685 = vmatprep.subr.mxu0 0.0
          %686 = vmatpush1.msra.mxu0 0.0
          %687 = vmatprep.subr.mxu0 0.0
          %688 = vmatpush1.msra.mxu0 0.0
          %689 = vmatprep.subr.mxu0 0.0
          %690 = vmatpush1.msra.mxu0 0.0
          %691 = vmatprep.subr.mxu0 0.0
          %692 = vmatpush1.msra.mxu0 0.0
          %693 = vmatprep.subr.mxu0 0.0
          %694 = vmatpush1.msra.mxu0 0.0
          %695 = vmatprep.subr.mxu0 0.0
          %696 = vmatpush1.msra.mxu0 0.0
          %697 = vmatprep.mubr.f32.mxu0 0.0
          %698 = vmatmul.mubr.f32.gmra.mrb[0].mxu0 %v586
          %v699 = vpop.f32.mrb[0].mxu0
          %v700 = vadd.f32 0.0, %v699
          %v701 = vpop.f32.mrb[0].mxu0
          %702 = vmatprep.mubr.f32.mxu0 0.0
          %703 = vmatmul.mubr.f32.gmra.mrb[0].mxu0 %v589
          %v704 = vpop.f32.mrb[0].mxu0
          %v705 = vadd.f32 0.0, %v704
          %v706 = vpop.f32.mrb[0].mxu0
          %707 = vmatprep.mubr.f32.mxu0 0.0
          %708 = vmatmul.mubr.f32.gmra.mrb[0].mxu0 %v592
          %v709 = vpop.f32.mrb[0].mxu0
          %v710 = vadd.f32 0.0, %v709
          %v711 = vpop.f32.mrb[0].mxu0
          %712 = vmatprep.mubr.f32.mxu0 0.0
          %713 = vmatmul.mubr.f32.gmra.mrb[0].mxu0 %v595
          %v714 = vpop.f32.mrb[0].mxu0
          %v715 = vadd.f32 0.0, %v714
          %v716 = vpop.f32.mrb[0].mxu0
          %717 = vmatprep.mubr.f32.mxu0 0.0
          %718 = vmatmul.mubr.f32.gmra.mrb[0].mxu0 %v598
          %v719 = vpop.f32.mrb[0].mxu0
          %v720 = vadd.f32 0.0, %v719
          %v721 = vpop.f32.mrb[0].mxu0
          %722 = vmatprep.mubr.f32.mxu0 0.0
          %723 = vmatmul.mubr.f32.gmra.mrb[0].mxu0 %v601
          %v724 = vpop.f32.mrb[0].mxu0
          %v725 = vadd.f32 0.0, %v724
          %v726 = vpop.f32.mrb[0].mxu0
          %727 = vmatprep.mubr.f32.mxu0 0.0
          %728 = vmatmul.mubr.f32.gmra.mrb[0].mxu0 %v604
          %v729 = vpop.f32.mrb[0].mxu0
          %v730 = vadd.f32 0.0, %v729
          %v731 = vpop.f32.mrb[0].mxu0
          %732 = vmatprep.mubr.f32.mxu0 0.0
          %733 = vmatmul.mubr.f32.gmra.mrb[0].mxu0 %v607
          %v734 = vpop.f32.mrb[0].mxu0
          %v735 = vadd.f32 0.0, %v734
          %v736 = vpop.f32.mrb[0].mxu0
          %737 = vmatprep.mubr.f32.mxu0 0.0
          %738 = vmatmul.mubr.f32.gmra.mrb[0].mxu0 %v610
          %v739 = vpop.f32.mrb[0].mxu0
          %v740 = vadd.f32 0.0, %v739
          %v741 = vpop.f32.mrb[0].mxu0
          %742 = vmatprep.mubr.f32.mxu0 0.0
          %743 = vmatmul.mubr.f32.gmra.mrb[0].mxu0 %v613
          %v744 = vpop.f32.mrb[0].mxu0
          %v745 = vadd.f32 0.0, %v744
          %v746 = vpop.f32.mrb[0].mxu0
          %747 = vmatprep.mubr.f32.mxu0 0.0
          %748 = vmatmul.mubr.f32.gmra.mrb[0].mxu0 %v616
          %v749 = vpop.f32.mrb[0].mxu0
          %v750 = vadd.f32 0.0, %v749
          %v751 = vpop.f32.mrb[0].mxu0
          %752 = vmatprep.mubr.f32.mxu0 0.0
          %753 = vmatmul.mubr.f32.gmra.mrb[0].mxu0 %v619
          %v754 = vpop.f32.mrb[0].mxu0
          %v755 = vadd.f32 0.0, %v754
          %v756 = vpop.f32.mrb[0].mxu0
          %757 = vmatprep.mubr.f32.mxu0 0.0
          %758 = vmatmul.mubr.f32.gmra.mrb[0].mxu0 %v622
          %v759 = vpop.f32.mrb[0].mxu0
          %v760 = vadd.f32 0.0, %v759
          %v761 = vpop.f32.mrb[0].mxu0
          %762 = vmatprep.mubr.f32.mxu0 0.0
          %763 = vmatmul.mubr.f32.gmra.mrb[0].mxu0 %v625
          %v764 = vpop.f32.mrb[0].mxu0
          %v765 = vadd.f32 0.0, %v764
          %v766 = vpop.f32.mrb[0].mxu0
          %767 = vmatprep.mubr.f32.mxu0 0.0
          %768 = vmatmul.mubr.f32.gmra.mrb[0].mxu0 %v628
          %v769 = vpop.f32.mrb[0].mxu0
          %v770 = vadd.f32 0.0, %v769
          %v771 = vpop.f32.mrb[0].mxu0
          %772 = vmatprep.mubr.f32.mxu0 0.0
          %773 = vmatmul.mubr.f32.gmra.mrb[0].mxu0 %v631
          %v774 = vpop.f32.mrb[0].mxu0
          %v775 = vadd.f32 0.0, %v774
          %v776 = vpop.f32.mrb[0].mxu0
          %777 = vdwg.mxu0
          %v778 = vmul.f32 %v700, %v566
          %v779 = vmul.f32 %v705, %v567
          %v780 = vmul.f32 %v710, %v568
          %v781 = vmul.f32 %v715, %v569
          %v782 = vmul.f32 %v720, %v570
          %v783 = vmul.f32 %v725, %v571
          %v784 = vmul.f32 %v730, %v572
          %v785 = vmul.f32 %v735, %v573
          %v786 = vmul.f32 %v740, %v574
          %v787 = vmul.f32 %v745, %v575
          %v788 = vmul.f32 %v750, %v576
          %v789 = vmul.f32 %v755, %v577
          %v790 = vmul.f32 %v760, %v578
          %v791 = vmul.f32 %v765, %v579
          %v792 = vmul.f32 %v770, %v580
          %v793 = vmul.f32 %v775, %v581
          %v794 = vsel %vm584, %v778, 0.0
          %795 = vadd.xlane.f32.xlu0 %v794
          %v796 = vpop.xlane.xlu0 %795
          %v797 = vsel %vm584, %v779, 0.0
          %798 = vadd.xlane.f32.xlu0 %v797
          %v799 = vpop.xlane.xlu0 %798
          %v800 = vsel %vm584, %v780, 0.0
          %801 = vadd.xlane.f32.xlu0 %v800
          %v802 = vpop.xlane.xlu0 %801
          %v803 = vsel %vm584, %v781, 0.0
          %804 = vadd.xlane.f32.xlu0 %v803
          %v805 = vpop.xlane.xlu0 %804
          %v806 = vsel %vm584, %v782, 0.0
          %807 = vadd.xlane.f32.xlu0 %v806
          %v808 = vpop.xlane.xlu0 %807
          %v809 = vsel %vm584, %v783, 0.0
          %810 = vadd.xlane.f32.xlu0 %v809
          %v811 = vpop.xlane.xlu0 %810
          %v812 = vsel %vm584, %v784, 0.0
          %813 = vadd.xlane.f32.xlu0 %v812
          %v814 = vpop.xlane.xlu0 %813
          %v815 = vsel %vm584, %v785, 0.0
          %816 = vadd.xlane.f32.xlu0 %v815
          %v817 = vpop.xlane.xlu0 %816
          %v818 = vsel %vm584, %v786, 0.0
          %819 = vadd.xlane.f32.xlu0 %v818
          %v820 = vpop.xlane.xlu0 %819
          %v821 = vsel %vm584, %v787, 0.0
          %822 = vadd.xlane.f32.xlu0 %v821
          %v823 = vpop.xlane.xlu0 %822
          %v824 = vsel %vm584, %v788, 0.0
          %825 = vadd.xlane.f32.xlu0 %v824
          %v826 = vpop.xlane.xlu0 %825
          %v827 = vsel %vm584, %v789, 0.0
          %828 = vadd.xlane.f32.xlu0 %v827
          %v829 = vpop.xlane.xlu0 %828
          %v830 = vsel %vm584, %v790, 0.0
          %831 = vadd.xlane.f32.xlu0 %v830
          %v832 = vpop.xlane.xlu0 %831
          %v833 = vsel %vm584, %v791, 0.0
          %834 = vadd.xlane.f32.xlu0 %v833
          %v835 = vpop.xlane.xlu0 %834
          %v836 = vsel %vm584, %v792, 0.0
          %837 = vadd.xlane.f32.xlu0 %v836
          %v838 = vpop.xlane.xlu0 %837
          %v839 = vsel %vm584, %v793, 0.0
          %840 = vadd.xlane.f32.xlu0 %v839
          %v841 = vpop.xlane.xlu0 %840
          %v842 = vsub.f32 10.0, %v796
          %v843 = vsub.f32 10.0, %v799
          %v844 = vsub.f32 10.0, %v802
          %v845 = vsub.f32 10.0, %v805
          %v846 = vsub.f32 10.0, %v808
          %v847 = vsub.f32 10.0, %v811
          %v848 = vsub.f32 10.0, %v814
          %v849 = vsub.f32 10.0, %v817
          %v850 = vsub.f32 10.0, %v820
          %v851 = vsub.f32 10.0, %v823
          %v852 = vsub.f32 10.0, %v826
          %v853 = vsub.f32 10.0, %v829
          %v854 = vsub.f32 10.0, %v832
          %v855 = vsub.f32 10.0, %v835
          %v856 = vsub.f32 10.0, %v838
          %v857 = vsub.f32 10.0, %v841
          %v858 = vmax.f32 %v842, 0.0
          %v859 = vmax.f32 %v843, 0.0
          %v860 = vmax.f32 %v844, 0.0
          %v861 = vmax.f32 %v845, 0.0
          %v862 = vmax.f32 %v846, 0.0
          %v863 = vmax.f32 %v847, 0.0
          %v864 = vmax.f32 %v848, 0.0
          %v865 = vmax.f32 %v849, 0.0
          %v866 = vmax.f32 %v850, 0.0
          %v867 = vmax.f32 %v851, 0.0
          %v868 = vmax.f32 %v852, 0.0
          %v869 = vmax.f32 %v853, 0.0
          %v870 = vmax.f32 %v854, 0.0
          %v871 = vmax.f32 %v855, 0.0
          %v872 = vmax.f32 %v856, 0.0
          %v873 = vmax.f32 %v857, 0.0
          %v874 = vlaneseq
          %v875 = vshrl.u32 %v874, 7
          %v876 = vadd.s32 %v875, 8
          %v877 = vadd.s32 %v875, 16
          %v878 = vadd.s32 %v875, 24
          %v879 = vadd.s32 %v875, 32
          %v880 = vadd.s32 %v875, 40
          %v881 = vadd.s32 %v875, 48
          %v882 = vadd.s32 %v875, 56
          %v883 = vadd.s32 %v875, 64
          %v884 = vadd.s32 %v875, 72
          %v885 = vadd.s32 %v875, 80
          %v886 = vadd.s32 %v875, 88
          %v887 = vadd.s32 %v875, 96
          %v888 = vadd.s32 %v875, 104
          %v889 = vadd.s32 %v875, 112
          %v890 = vadd.s32 %v875, 120
          %v891 = vstv %s150
          %v892 = vadd.s32 %v891, %v875
          %v893 = vadd.s32 %v891, %v876
          %v894 = vadd.s32 %v891, %v877
          %v895 = vadd.s32 %v891, %v878
          %v896 = vadd.s32 %v891, %v879
          %v897 = vadd.s32 %v891, %v880
          %v898 = vadd.s32 %v891, %v881
          %v899 = vadd.s32 %v891, %v882
          %v900 = vadd.s32 %v891, %v883
          %v901 = vadd.s32 %v891, %v884
          %v902 = vadd.s32 %v891, %v885
          %v903 = vadd.s32 %v891, %v886
          %v904 = vadd.s32 %v891, %v887
          %v905 = vadd.s32 %v891, %v888
          %v906 = vadd.s32 %v891, %v889
          %v907 = vadd.s32 %v891, %v890
          %v908 = vstv %s147
          %vm909 = vcmp.lt.s32.totalorder %v892, %v908
          %vm910 = vcmp.lt.s32.totalorder %v893, %v908
          %vm911 = vcmp.lt.s32.totalorder %v894, %v908
          %vm912 = vcmp.lt.s32.totalorder %v895, %v908
          %vm913 = vcmp.lt.s32.totalorder %v896, %v908
          %vm914 = vcmp.lt.s32.totalorder %v897, %v908
          %vm915 = vcmp.lt.s32.totalorder %v898, %v908
          %vm916 = vcmp.lt.s32.totalorder %v899, %v908
          %vm917 = vcmp.lt.s32.totalorder %v900, %v908
          %vm918 = vcmp.lt.s32.totalorder %v901, %v908
          %vm919 = vcmp.lt.s32.totalorder %v902, %v908
          %vm920 = vcmp.lt.s32.totalorder %v903, %v908
          %vm921 = vcmp.lt.s32.totalorder %v904, %v908
          %vm922 = vcmp.lt.s32.totalorder %v905, %v908
          %vm923 = vcmp.lt.s32.totalorder %v906, %v908
          %vm924 = vcmp.lt.s32.totalorder %v907, %v908
          %v925 = vld [vmem:[#allocation4] sm:$0x1]
          %v926 = vsel %vm909, %v858, 0.0
          %v927 = vsel %vm910, %v859, 0.0
          %v928 = vsel %vm911, %v860, 0.0
          %v929 = vsel %vm912, %v861, 0.0
          %v930 = vsel %vm913, %v862, 0.0
          %v931 = vsel %vm914, %v863, 0.0
          %v932 = vsel %vm915, %v864, 0.0
          %v933 = vsel %vm916, %v865, 0.0
          %v934 = vsel %vm917, %v866, 0.0
          %v935 = vsel %vm918, %v867, 0.0
          %v936 = vsel %vm919, %v868, 0.0
          %v937 = vsel %vm920, %v869, 0.0
          %v938 = vsel %vm921, %v870, 0.0
          %v939 = vsel %vm922, %v871, 0.0
          %v940 = vsel %vm923, %v872, 0.0
          %v941 = vsel %vm924, %v873, 0.0
          %v942 = vadd.f32 %v926, %v927
          %v943 = vadd.f32 %v942, %v928
          %v944 = vadd.f32 %v943, %v929
          %v945 = vadd.f32 %v944, %v930
          %v946 = vadd.f32 %v945, %v931
          %v947 = vadd.f32 %v946, %v932
          %v948 = vadd.f32 %v947, %v933
          %v949 = vadd.f32 %v948, %v934
          %v950 = vadd.f32 %v949, %v935
          %v951 = vadd.f32 %v950, %v936
          %v952 = vadd.f32 %v951, %v937
          %v953 = vadd.f32 %v952, %v938
          %v954 = vadd.f32 %v953, %v939
          %v955 = vadd.f32 %v954, %v940
          %v956 = vadd.f32 %v955, %v941
          %v957 = vrot.slane %v956, 4
          %v958 = vadd.f32 %v956, %v957
          %v959 = vrot.slane %v958, 2
          %v960 = vadd.f32 %v958, %v959
          %v961 = vrot.slane %v960, 1
          %v962 = vadd.f32 %v960, %v961
          %v963 = vadd.f32 %v925, %v962
          %vm964 = vcmask 0
          %965 = vst.msk [vmem:[#allocation4] sm:$0x1] %vm964, %v963
        $region70: #{tpu_custom_call.1} parent=23 // pred_fallthru
          _
        %p966 = scmp.eq.s32.totalorder %s23, 1
        // Predicated region
        $region71: #{tpu_custom_call.1} parent=23 // pred_check
          %p967 = pneg %p966
        $region72: #{tpu_custom_call.1} parent=23 // pred_check_branch
          %969 = sbr.rel (%p967) target = $region74
        $region73: #{tpu_custom_call.1} parent=23 // pred_region
          %v970 = vld [vmem:[#allocation4] sm:$0x1]
          %v972 = vlaneseq
          %v973 = vshrl.u32 %v972, 7
          %v974 = vsub.s32 0, %v973
          %v975 = vrot.slane %v970, %v974
          %976 = vset.pattern.permute.xlu0 0
          %977 = vperm.xlu0 %976, %v975
          %v978 = vpop.permute.xlu0 %977
          %980 = vst [vmem:[%s135] sm:$0xff] %v978
        $region74: #{tpu_custom_call.1} parent=23 // pred_fallthru
          _
        %s981 = sand.u32 %s68, 1
        %s982 = scalar_lea.sflag [#allocation9], %s981
        %s983 = sand.u32 %s68, 1
        %s984 = smul.addr %s983, 8
        %s985 = scalar_lea.vmem [#allocation8], %s984
        // Predicated region
        $region75: #{tpu_custom_call.1} parent=23 // pred_check
          %p986 = pneg %p78
        $region76: #{tpu_custom_call.1} parent=23 // pred_check_branch
          %988 = sbr.rel (%p986) target = $region78
        $region77: #{tpu_custom_call.1} parent=23 // pred_region
          %s990 = ssub.s32 128, 128
          %991 = vsyncadd %s982, %s990
          %s992 = smul.addr %s22, 128
          %s993 = scalar_lea.hbm %s3, %s992
          %s995 = sshll.u32 %s985, 4
          %s996 = int_to_ptr.vmem [resolvable:$true] %s995
          %998 = dma.vmem_to_hbm [thread:$0]  %s996, 128, %s993, %s982
        $region78: #{tpu_custom_call.1} parent=23 // pred_fallthru
          _
      $region24: #{tpu_custom_call.1} parent=5 // pred_fallthru
        _
      %p999 = scmp.le.s32.totalorder 2, %s13
      // Predicated region
      $region79: #{tpu_custom_call.1} parent=5 // pred_check
        %p1000 = pneg %p999
      $region80: #{tpu_custom_call.1} parent=5 // pred_check_branch
        %1002 = sbr.rel (%p1000) target = $region82
      $region81: #{tpu_custom_call.1} parent=5 // pred_region
        %s1003 = ssub.s32 %s13, 2
        // Predicated region
        $region83: #{tpu_custom_call.1} parent=81 // pred_check
          %p1004 = pneg %p84
        $region84: #{tpu_custom_call.1} parent=81 // pred_check_branch
          %1006 = sbr.rel (%p1004) target = $region86
        $region85: #{tpu_custom_call.1} parent=81 // pred_region
          %s1007 = sand.u32 %s69, 1
          %s1008 = scalar_lea.sflag [#allocation9], %s1007
          %s1009 = sand.u32 %s69, 1
          %s1010 = smul.addr %s1009, 8
          %s1011 = scalar_lea.vmem [#allocation8], %s1010
          %1012 = dma.done %s1008, 128
        $region86: #{tpu_custom_call.1} parent=81 // pred_fallthru
          _
      $region82: #{tpu_custom_call.1} parent=5 // pred_fallthru
        _
    $region6: #{tpu_custom_call.1} parent=1 // loop_footer
      %s17 = sadd.s32 1, %s13
    $region7: #{tpu_custom_call.1} parent=1 // loop_footer_branch
      %12 = sbr.rel target = $region3
    $region8: #{tpu_custom_call.1} parent=1 // loop_exit
      _
    %1013 = vsyncpa [#allocation9], 1
    %s1014 = scalar_lea.sflag [#allocation9], 1
    %1015 = vsyncpa %s1014, 1
  %1016 = vsyncmov [#allocation5]
  %s1017 = vpop.sfrf %1016
  %p1018 = scmp.eq.s32.totalorder %s1017, 0
  %p1019 = pneg %p1018
  %1021 = shalt.err (%p1019)

</llo_original>
